<compile_context>
chip_gen: v7x
topology: tpu7x:2x2x1
jax: 0.10.0
libtpu: 0.0.40
codegen_flags: <defaults>
</compile_context>

<pallas_src>
import functools
import math

import jax
import jax.numpy as jnp
from jax.experimental import pallas as pl
from jax.experimental.pallas import tpu as pltpu


def _cola_proj_bias_kernel(x_ref, w_ref, b_ref, o_ref, *, precision):
    # x_ref: (tm, rank), w_ref: (rank, tn), b_ref: (1, tn) f32, o_ref: (tm, tn)
    acc = jnp.dot(
        x_ref[...], w_ref[...],
        preferred_element_type=jnp.float32, precision=precision,
    )
    o_ref[...] = (acc + b_ref[...]).astype(o_ref.dtype)


def _cola_proj_nobias_kernel(x_ref, w_ref, o_ref, *, precision):
    acc = jnp.dot(
        x_ref[...], w_ref[...],
        preferred_element_type=jnp.float32, precision=precision,
    )
    o_ref[...] = acc.astype(o_ref.dtype)


def _round_up(v, mult):
    return ((v + mult - 1) // mult) * mult


@functools.partial(jax.jit, static_argnames=("block_m", "block_n"))
def cola_m_up_proj(x, cola_b, bias=None, *, block_m=1024, block_n=2048):
    """Pallas implementation of ColaMUpProjLayer.forward.

    x      : (..., rank)
    cola_b : (rank, out_features)
    bias   : (out_features,) or None
    returns: (..., out_features), dtype of x
    """
    *lead, rank = x.shape
    rank_w, out_features = cola_b.shape
    assert rank == rank_w, "contraction dim mismatch"

    m = math.prod(lead) if lead else 1
    x2d = x.reshape(m, rank)
    has_bias = bias is not None

    out_dtype = x.dtype
    x_isz = jnp.dtype(x.dtype).itemsize
    w_isz = jnp.dtype(cola_b.dtype).itemsize
    o_isz = jnp.dtype(out_dtype).itemsize

    # --- Tile selection -------------------------------------------------------
    # tm: sublane-multiple row tile (no bigger than the rounded-up row count).
    # tn: lane-dense (multiple of 128) or the full out_features extent.
    sublane = 16 if x.dtype == jnp.bfloat16 else 8
    tm = _round_up(min(block_m, _round_up(m, sublane)), sublane)
    if out_features <= 128:
        tn = out_features
    else:
        tn = min(_round_up(block_n, 128), _round_up(out_features, 128))

    # v7x megacore: guarantee >=2 grid blocks along a parallel axis when the
    # problem is big enough to split, so both TensorCores get work.
    if pl.cdiv(m, tm) * pl.cdiv(out_features, tn) < 2 and out_features >= 256:
        tn = max(128, _round_up(pl.cdiv(out_features, 2), 128))

    n_blocks = pl.cdiv(out_features, tn)
    m_blocks = pl.cdiv(m, tm)
    # M is the inner (fastest) grid axis: weight/bias block index is constant
    # across it, so Pallas skips their redundant DMAs.
    grid = (n_blocks, m_blocks)

    precision = (
        jax.lax.Precision.HIGHEST
        if x.dtype == jnp.float32
        else jax.lax.Precision.DEFAULT
    )

    in_specs = [
        pl.BlockSpec((tm, rank), lambda j, i: (i, 0)),
        pl.BlockSpec((rank, tn), lambda j, i: (0, j)),
    ]
    operands = [x2d, cola_b]
    if has_bias:
        bias2d = bias.astype(jnp.float32).reshape(1, out_features)
        in_specs.append(pl.BlockSpec((1, tn), lambda j, i: (0, j)))
        operands.append(bias2d)
        kernel = functools.partial(_cola_proj_bias_kernel, precision=precision)
    else:
        kernel = functools.partial(_cola_proj_nobias_kernel, precision=precision)

    # --- VMEM budget derived from the actual resident footprint --------------
    footprint = (
        2 * tm * rank * x_isz          # x tile, double-buffered
        + 2 * rank * tn * w_isz        # weight tile, double-buffered
        + 2 * tm * tn * o_isz          # output tile, double-buffered
        + tm * tn * 4                  # f32 accumulator temporary
    )
    if has_bias:
        footprint += 2 * tn * 4
    vmem_limit = int(min(max(2 * footprint, 32 * 1024 * 1024), 64 * 1024 * 1024))

    cost = pl.CostEstimate(
        flops=2 * m * rank * out_features,
        transcendentals=0,
        bytes_accessed=(
            m * rank * x_isz
            + rank * out_features * w_isz
            + (out_features * 4 if has_bias else 0)
            + m * out_features * o_isz
        ),
    )

    out2d = pl.pallas_call(
        kernel,
        out_shape=jax.ShapeDtypeStruct((m, out_features), out_dtype),
        grid_spec=pltpu.PrefetchScalarGridSpec(
            num_scalar_prefetch=0,
            grid=grid,
            in_specs=in_specs,
            out_specs=pl.BlockSpec((tm, tn), lambda j, i: (i, j)),
        ),
        compiler_params=pltpu.CompilerParams(
            dimension_semantics=("parallel", "parallel"),
            vmem_limit_bytes=vmem_limit,
        ),
        cost_estimate=cost,
    )(*operands)

    return out2d.reshape(*lead, out_features)


def init_cola_m_up_proj_params(key, in_features, out_features, rank, bias=True):
    """Deterministic re-implementation of ColaMUpProjLayer.__init__ param init."""
    k_b, k_bias = jax.random.split(key)
    target_sdv = (in_features + out_features) ** (-0.5)
    cola_b = (
        jax.random.normal(k_b, (rank, out_features), dtype=jnp.float32)
        / rank ** 0.25
        * target_sdv ** 0.5
    )
    if not bias:
        return cola_b, None
    stdv = 1.0 / out_features ** 0.5
    bias_p = jax.random.uniform(
        k_bias, (out_features,), dtype=jnp.float32, minval=-stdv, maxval=stdv
    )
    return cola_b, bias_p


if __name__ == "__main__":
    key = jax.random.PRNGKey(0)
    k_params, k_x = jax.random.split(key)

    # Small shapes consistent with the module: x: (batch, seq, rank)
    batch, seq = 2, 8
    in_features, out_features, rank = 32, 32, 16

    cola_b, bias = init_cola_m_up_proj_params(
        k_params, in_features, out_features, rank, bias=True
    )
    x = jax.random.normal(k_x, (batch, seq, rank), dtype=jnp.float32)

    # With bias.
    out = cola_m_up_proj(x, cola_b, bias)
    out = jax.block_until_ready(out)
    ref = jnp.matmul(x, cola_b) + bias
    assert out.shape == (batch, seq, out_features)
    assert jnp.allclose(out, ref, atol=1e-5, rtol=1e-5)

    # Without bias (trace-time specialized path: no bias DMA, no add).
    out_nb = cola_m_up_proj(x, cola_b, None)
    out_nb = jax.block_until_ready(out_nb)
    ref_nb = jnp.matmul(x, cola_b)
    assert jnp.allclose(out_nb, ref_nb, atol=1e-5, rtol=1e-5)

    print("KERNEL_OK")
</pallas_src>

<mosaic_0001>
module attributes {stable_mosaic.version = 11 : i64} {
  func.func @_cola_proj_bias_kernel(%arg0: i32, %arg1: i32, %arg2: memref<16x16xf32, #tpu.memory_space<vmem>>, %arg3: memref<16x32xf32, #tpu.memory_space<vmem>>, %arg4: memref<1x32xf32, #tpu.memory_space<vmem>>, %arg5: memref<16x32xf32, #tpu.memory_space<vmem>>) attributes {dimension_semantics = [#tpu.dimension_semantics<parallel>, #tpu.dimension_semantics<parallel>], iteration_bounds = array<i64: 1, 1>, scalar_prefetch = 0 : i64, scratch_operands = 0 : i64, tpu.core_type = #tpu.core_type<tc>, window_params = [{transform_indices = @transform_0, window_bounds = array<i64: 16, 16>}, {transform_indices = @transform_1, window_bounds = array<i64: 16, 32>}, {transform_indices = @transform_2, window_bounds = array<i64: 1, 32>}, {transform_indices = @transform_3, window_bounds = array<i64: 16, 32>}]} {
    %c0 = arith.constant 0 : index
    %c0_0 = arith.constant 0 : index
    %0 = vector.load %arg2[%c0, %c0_0] : memref<16x16xf32, #tpu.memory_space<vmem>>, vector<16x16xf32>
    %c0_1 = arith.constant 0 : index
    %c0_2 = arith.constant 0 : index
    %1 = vector.load %arg3[%c0_1, %c0_2] : memref<16x32xf32, #tpu.memory_space<vmem>>, vector<16x32xf32>
    %cst = arith.constant dense<0.000000e+00> : vector<16x32xf32>
    %2 = tpu.matmul %0, %1, %cst {dimension_numbers = #tpu.dot_dimension_numbers<[1], [0], [0], [1], [0, 0, 1, 1], [], []>, precision = #tpu.contract_precision<fp32>} : vector<16x16xf32>, vector<16x32xf32>, vector<16x32xf32> -> vector<16x32xf32>
    %c0_3 = arith.constant 0 : index
    %c0_4 = arith.constant 0 : index
    %3 = vector.load %arg4[%c0_3, %c0_4] : memref<1x32xf32, #tpu.memory_space<vmem>>, vector<1x32xf32>
    %4 = vector.broadcast %3 : vector<1x32xf32> to vector<16x32xf32>
    %5 = arith.addf %2, %4 : vector<16x32xf32>
    %c0_5 = arith.constant 0 : index
    %c0_6 = arith.constant 0 : index
    %6 = vector.load %arg5[%c0_5, %c0_6] : memref<16x32xf32, #tpu.memory_space<vmem>>, vector<16x32xf32>
    tpu.vector_store %arg5[%c0_5, %c0_6], %5 {strides = array<i32>} : memref<16x32xf32, #tpu.memory_space<vmem>>, vector<16x32xf32>,
    return
  }
  func.func @transform_0(%arg0: i32, %arg1: i32) -> (i32, i32) {
    %c0_i32 = arith.constant 0 : i32
    %c0_i32_0 = arith.constant 0 : i32
    return %arg1, %c0_i32 : i32, i32
  }
  func.func @transform_1(%arg0: i32, %arg1: i32) -> (i32, i32) {
    %c0_i32 = arith.constant 0 : i32
    %c0_i32_0 = arith.constant 0 : i32
    return %c0_i32, %arg0 : i32, i32
  }
  func.func @transform_2(%arg0: i32, %arg1: i32) -> (i32, i32) {
    %c0_i32 = arith.constant 0 : i32
    %c0_i32_0 = arith.constant 0 : i32
    return %c0_i32, %arg0 : i32, i32
  }
  func.func @transform_3(%arg0: i32, %arg1: i32) -> (i32, i32) {
    %c0_i32 = arith.constant 0 : i32
    return %arg1, %arg0 : i32, i32
  }
}

</mosaic_0001>

<llo_original>
// kernel: cola_m_up_proj.1
$region0: #{cola_m_up_proj.1}
  #allocation0 [shape = 'u32[]', space=smem, size = 0x4, offset = 0x4, fixed_abs, tag = 'smem constant byte address 0x4 - core index']
  #allocation1 [shape = 'u32[144,128]{1,0:T(1,128)}', space=vmem, size = 0x12000, scoped, tag = 'internal scratch']
  %s0 = inlined_call_operand.hbm [shape: f32[16,16], index: 0, kind: input, shape index: {}]
  %s1 = inlined_call_operand.hbm [shape: f32[16,32], index: 1, kind: input, shape index: {}]
  %s2 = inlined_call_operand.vmem [shape: f32[1,32], index: 2, kind: input, shape index: {}]
  %s3 = inlined_call_operand.hbm [shape: f32[16,32], index: 3, kind: output, shape index: {}]
  %s4 = sld [smem:[#allocation0]]
  $region30: #{cola_m_up_proj.1} parent=0
    _
  %s6 = ssub.s32 1, %s4
  %s7 = scalar_select 0, %s6, %s4
  $region1: #{cola_m_up_proj.1} parent=0
    #allocation2 [shape = 'u8[8192]{0}', space=vmem, size = 0x2000, scoped, tag = 'input window, operand 0, single buffered']
    #allocation3 [shape = 's32[1]{0}', space=sflag, size = 0x4, scoped, tag = 'scoped memory for cola_m_up_proj.1']
    #allocation4 [shape = 's32[1]{0}', space=sflag, size = 0x4, scoped, tag = 'scoped memory for cola_m_up_proj.1']
    #allocation5 [shape = 'u8[8192]{0}', space=vmem, size = 0x2000, scoped, tag = 'input window, operand 1, single buffered']
    #allocation6 [shape = 's32[1]{0}', space=sflag, size = 0x4, scoped, tag = 'scoped memory for cola_m_up_proj.1']
    #allocation7 [shape = 'u8[8192]{0}', space=vmem, size = 0x2000, scoped, tag = 'output window, operand 0, single buffered']
    %8 = vsyncpa [#allocation3], 0
    %9 = vsyncpa [#allocation6], 0
    %10 = vsyncpa [#allocation4], 0
    // Predicated region
    $region2: #{cola_m_up_proj.1} parent=1 // pred_check
      _
    $region3: #{cola_m_up_proj.1} parent=1 // pred_check_branch
      %12 = sbr.rel (0) target = $region5
    $region4: #{cola_m_up_proj.1} parent=1 // pred_region
      %s14 = ssub.s32 256, 256
      %15 = vsyncadd [#allocation3], %s14
      %s16 = sshll.u32 [#allocation2], 4
      %s17 = int_to_ptr.vmem [resolvable:$true] %s16
      %22 = dma.hbm_to_vmem [thread:$0]  %s0, 256, %s17, [#allocation3], 128, 128, 8
    $region5: #{cola_m_up_proj.1} parent=1 // pred_fallthru
      _
    // Predicated region
    $region6: #{cola_m_up_proj.1} parent=1 // pred_check
      _
    $region7: #{cola_m_up_proj.1} parent=1 // pred_check_branch
      %24 = sbr.rel (0) target = $region9
    $region8: #{cola_m_up_proj.1} parent=1 // pred_region
      %s26 = ssub.s32 256, 256
      %27 = vsyncadd [#allocation6], %s26
      %s28 = sshll.u32 [#allocation5], 4
      %s29 = int_to_ptr.vmem [resolvable:$true] %s28
      %34 = dma.hbm_to_vmem [thread:$0]  %s1, 256, %s29, [#allocation6], 128, 128, 8
    $region9: #{cola_m_up_proj.1} parent=1 // pred_fallthru
      _
    // Predicated region
    $region10: #{cola_m_up_proj.1} parent=1 // pred_check
      _
    $region11: #{cola_m_up_proj.1} parent=1 // pred_check_branch
      %36 = sbr.rel (0) target = $region13
    $region12: #{cola_m_up_proj.1} parent=1 // pred_region
      _
    $region13: #{cola_m_up_proj.1} parent=1 // pred_fallthru
      _
    // Predicated region
    $region14: #{cola_m_up_proj.1} parent=1 // pred_check
      _
    $region15: #{cola_m_up_proj.1} parent=1 // pred_check_branch
      %38 = sbr.rel (0) target = $region17
    $region16: #{cola_m_up_proj.1} parent=1 // pred_region
      %39 = dma.done [#allocation3], 256
    $region17: #{cola_m_up_proj.1} parent=1 // pred_fallthru
      _
    // Predicated region
    $region18: #{cola_m_up_proj.1} parent=1 // pred_check
      _
    $region19: #{cola_m_up_proj.1} parent=1 // pred_check_branch
      %41 = sbr.rel (0) target = $region21
    $region20: #{cola_m_up_proj.1} parent=1 // pred_region
      %42 = dma.done [#allocation6], 256
    $region21: #{cola_m_up_proj.1} parent=1 // pred_fallthru
      _
    %v43 = vld [vmem:[#allocation2] sm:$0xff]
    %v44 = vld [vmem:[#allocation2 + $0x8] sm:$0xff]
    %v45 = vld [vmem:[#allocation5] sm:$0xff]
    %v46 = vld [vmem:[#allocation5 + $0x8] sm:$0xff]
    %v47 = vld [vmem:[%s2] sm:$0x1]
    %v49 = vlaneseq
    %v50 = vshrl.u32 %v49, 7
    %v51 = vsub.s32 0, %v50
    %v52 = vrot.slane %v47, %v51
    %vm54 = vcmask 130048
    %v56 = vsel %vm54, %v43, 0
    %v59 = vsel %vm54, %v44, 0
    %61 = vmatprep.subr.mxu0 0.0
    %v62 = vand.u32 %v45, 4294901760
    %63 = vmatpush1.msra.mxu0 %v62
    %64 = vmatprep.subr.mxu0 0.0
    %v65 = vand.u32 %v46, 4294901760
    %66 = vmatpush1.msra.mxu0 %v65
    %67 = vmatprep.subr.mxu0 0.0
    %68 = vmatpush1.msra.mxu0 0.0
    %69 = vmatprep.subr.mxu0 0.0
    %70 = vmatpush1.msra.mxu0 0.0
    %71 = vmatprep.subr.mxu0 0.0
    %72 = vmatpush1.msra.mxu0 0.0
    %73 = vmatprep.subr.mxu0 0.0
    %74 = vmatpush1.msra.mxu0 0.0
    %75 = vmatprep.subr.mxu0 0.0
    %76 = vmatpush1.msra.mxu0 0.0
    %77 = vmatprep.subr.mxu0 0.0
    %78 = vmatpush1.msra.mxu0 0.0
    %79 = vmatprep.subr.mxu0 0.0
    %80 = vmatpush1.msra.mxu0 0.0
    %81 = vmatprep.subr.mxu0 0.0
    %82 = vmatpush1.msra.mxu0 0.0
    %83 = vmatprep.subr.mxu0 0.0
    %84 = vmatpush1.msra.mxu0 0.0
    %85 = vmatprep.subr.mxu0 0.0
    %86 = vmatpush1.msra.mxu0 0.0
    %87 = vmatprep.subr.mxu0 0.0
    %88 = vmatpush1.msra.mxu0 0.0
    %89 = vmatprep.subr.mxu0 0.0
    %90 = vmatpush1.msra.mxu0 0.0
    %91 = vmatprep.subr.mxu0 0.0
    %92 = vmatpush1.msra.mxu0 0.0
    %93 = vmatprep.subr.mxu0 0.0
    %94 = vmatpush1.msra.mxu0 0.0
    %95 = vmatprep.subr.mxu0 0.0
    %96 = vmatpush1.msra.mxu0 0.0
    %97 = vmatprep.subr.mxu0 0.0
    %98 = vmatpush1.msra.mxu0 0.0
    %99 = vmatprep.subr.mxu0 0.0
    %100 = vmatpush1.msra.mxu0 0.0
    %101 = vmatprep.subr.mxu0 0.0
    %102 = vmatpush1.msra.mxu0 0.0
    %103 = vmatprep.subr.mxu0 0.0
    %104 = vmatpush1.msra.mxu0 0.0
    %105 = vmatprep.subr.mxu0 0.0
    %106 = vmatpush1.msra.mxu0 0.0
    %107 = vmatprep.subr.mxu0 0.0
    %108 = vmatpush1.msra.mxu0 0.0
    %109 = vmatprep.subr.mxu0 0.0
    %110 = vmatpush1.msra.mxu0 0.0
    %111 = vmatprep.subr.mxu0 0.0
    %112 = vmatpush1.msra.mxu0 0.0
    %113 = vmatprep.subr.mxu0 0.0
    %114 = vmatpush1.msra.mxu0 0.0
    %115 = vmatprep.subr.mxu0 0.0
    %116 = vmatpush1.msra.mxu0 0.0
    %117 = vmatprep.subr.mxu0 0.0
    %118 = vmatpush1.msra.mxu0 0.0
    %119 = vmatprep.subr.mxu0 0.0
    %120 = vmatpush1.msra.mxu0 0.0
    %121 = vmatprep.subr.mxu0 0.0
    %122 = vmatpush1.msra.mxu0 0.0
    %123 = vmatprep.subr.mxu0 0.0
    %124 = vmatpush1.msra.mxu0 0.0
    %125 = vmatprep.subr.mxu0 0.0
    %126 = vmatpush1.msra.mxu0 0.0
    %127 = vmatprep.mubr.f32.mxu0 0.0
    %v128 = vand.u32 %v56, 4294901760
    %v129 = vsub.f32 %v56, %v128
    %v130 = vand.u32 %v129, 4294901760
    %v131 = vsub.f32 %v129, %v130
    %v132 = vand.u32 %v131, 4294901760
    %133 = vmatmul.mubr.f32.gmra.mrb[0].mxu0 %v132
    %v134 = vpop.f32.mrb[0].mxu0
    %v135 = vadd.f32 %v52, %v134
    %v136 = vpop.f32.mrb[0].mxu0
    %137 = vmatprep.mubr.f32.mxu0 0.0
    %v138 = vand.u32 %v59, 4294901760
    %v139 = vsub.f32 %v59, %v138
    %v140 = vand.u32 %v139, 4294901760
    %v141 = vsub.f32 %v139, %v140
    %v142 = vand.u32 %v141, 4294901760
    %143 = vmatmul.mubr.f32.gmra.mrb[0].mxu0 %v142
    %v144 = vpop.f32.mrb[0].mxu0
    %v145 = vadd.f32 %v52, %v144
    %v146 = vpop.f32.mrb[0].mxu0
    %147 = vdwg.mxu0
    %148 = vmatprep.subr.mxu0 0.0
    %v149 = vand.u32 %v45, 4294901760
    %v150 = vsub.f32 %v45, %v149
    %v151 = vand.u32 %v150, 4294901760
    %v152 = vsub.f32 %v150, %v151
    %v153 = vand.u32 %v152, 4294901760
    %154 = vmatpush1.msra.mxu0 %v153
    %155 = vmatprep.subr.mxu0 0.0
    %v156 = vand.u32 %v46, 4294901760
    %v157 = vsub.f32 %v46, %v156
    %v158 = vand.u32 %v157, 4294901760
    %v159 = vsub.f32 %v157, %v158
    %v160 = vand.u32 %v159, 4294901760
    %161 = vmatpush1.msra.mxu0 %v160
    %162 = vmatprep.subr.mxu0 0.0
    %163 = vmatpush1.msra.mxu0 0.0
    %164 = vmatprep.subr.mxu0 0.0
    %165 = vmatpush1.msra.mxu0 0.0
    %166 = vmatprep.subr.mxu0 0.0
    %167 = vmatpush1.msra.mxu0 0.0
    %168 = vmatprep.subr.mxu0 0.0
    %169 = vmatpush1.msra.mxu0 0.0
    %170 = vmatprep.subr.mxu0 0.0
    %171 = vmatpush1.msra.mxu0 0.0
    %172 = vmatprep.subr.mxu0 0.0
    %173 = vmatpush1.msra.mxu0 0.0
    %174 = vmatprep.subr.mxu0 0.0
    %175 = vmatpush1.msra.mxu0 0.0
    %176 = vmatprep.subr.mxu0 0.0
    %177 = vmatpush1.msra.mxu0 0.0
    %178 = vmatprep.subr.mxu0 0.0
    %179 = vmatpush1.msra.mxu0 0.0
    %180 = vmatprep.subr.mxu0 0.0
    %181 = vmatpush1.msra.mxu0 0.0
    %182 = vmatprep.subr.mxu0 0.0
    %183 = vmatpush1.msra.mxu0 0.0
    %184 = vmatprep.subr.mxu0 0.0
    %185 = vmatpush1.msra.mxu0 0.0
    %186 = vmatprep.subr.mxu0 0.0
    %187 = vmatpush1.msra.mxu0 0.0
    %188 = vmatprep.subr.mxu0 0.0
    %189 = vmatpush1.msra.mxu0 0.0
    %190 = vmatprep.subr.mxu0 0.0
    %191 = vmatpush1.msra.mxu0 0.0
    %192 = vmatprep.subr.mxu0 0.0
    %193 = vmatpush1.msra.mxu0 0.0
    %194 = vmatprep.subr.mxu0 0.0
    %195 = vmatpush1.msra.mxu0 0.0
    %196 = vmatprep.subr.mxu0 0.0
    %197 = vmatpush1.msra.mxu0 0.0
    %198 = vmatprep.subr.mxu0 0.0
    %199 = vmatpush1.msra.mxu0 0.0
    %200 = vmatprep.subr.mxu0 0.0
    %201 = vmatpush1.msra.mxu0 0.0
    %202 = vmatprep.subr.mxu0 0.0
    %203 = vmatpush1.msra.mxu0 0.0
    %204 = vmatprep.subr.mxu0 0.0
    %205 = vmatpush1.msra.mxu0 0.0
    %206 = vmatprep.subr.mxu0 0.0
    %207 = vmatpush1.msra.mxu0 0.0
    %208 = vmatprep.subr.mxu0 0.0
    %209 = vmatpush1.msra.mxu0 0.0
    %210 = vmatprep.subr.mxu0 0.0
    %211 = vmatpush1.msra.mxu0 0.0
    %212 = vmatprep.subr.mxu0 0.0
    %213 = vmatpush1.msra.mxu0 0.0
    %214 = vmatprep.subr.mxu0 0.0
    %215 = vmatpush1.msra.mxu0 0.0
    %216 = vmatprep.subr.mxu0 0.0
    %217 = vmatpush1.msra.mxu0 0.0
    %218 = vmatprep.subr.mxu0 0.0
    %219 = vmatpush1.msra.mxu0 0.0
    %220 = vmatprep.subr.mxu0 0.0
    %221 = vmatpush1.msra.mxu0 0.0
    %222 = vmatprep.mubr.f32.mxu0 0.0
    %v223 = vand.u32 %v56, 4294901760
    %224 = vmatmul.mubr.f32.gmra.mrb[0].mxu0 %v223
    %v225 = vpop.f32.mrb[0].mxu0
    %v226 = vadd.f32 %v135, %v225
    %v227 = vpop.f32.mrb[0].mxu0
    %228 = vmatprep.mubr.f32.mxu0 0.0
    %v229 = vand.u32 %v59, 4294901760
    %230 = vmatmul.mubr.f32.gmra.mrb[0].mxu0 %v229
    %v231 = vpop.f32.mrb[0].mxu0
    %v232 = vadd.f32 %v145, %v231
    %v233 = vpop.f32.mrb[0].mxu0
    %234 = vdwg.mxu0
    %235 = vmatprep.subr.mxu0 0.0
    %v236 = vand.u32 %v45, 4294901760
    %v237 = vsub.f32 %v45, %v236
    %238 = vmatpush1.msra.mxu0 %v237
    %239 = vmatprep.subr.mxu0 0.0
    %v240 = vand.u32 %v46, 4294901760
    %v241 = vsub.f32 %v46, %v240
    %242 = vmatpush1.msra.mxu0 %v241
    %243 = vmatprep.subr.mxu0 0.0
    %244 = vmatpush1.msra.mxu0 0.0
    %245 = vmatprep.subr.mxu0 0.0
    %246 = vmatpush1.msra.mxu0 0.0
    %247 = vmatprep.subr.mxu0 0.0
    %248 = vmatpush1.msra.mxu0 0.0
    %249 = vmatprep.subr.mxu0 0.0
    %250 = vmatpush1.msra.mxu0 0.0
    %251 = vmatprep.subr.mxu0 0.0
    %252 = vmatpush1.msra.mxu0 0.0
    %253 = vmatprep.subr.mxu0 0.0
    %254 = vmatpush1.msra.mxu0 0.0
    %255 = vmatprep.subr.mxu0 0.0
    %256 = vmatpush1.msra.mxu0 0.0
    %257 = vmatprep.subr.mxu0 0.0
    %258 = vmatpush1.msra.mxu0 0.0
    %259 = vmatprep.subr.mxu0 0.0
    %260 = vmatpush1.msra.mxu0 0.0
    %261 = vmatprep.subr.mxu0 0.0
    %262 = vmatpush1.msra.mxu0 0.0
    %263 = vmatprep.subr.mxu0 0.0
    %264 = vmatpush1.msra.mxu0 0.0
    %265 = vmatprep.subr.mxu0 0.0
    %266 = vmatpush1.msra.mxu0 0.0
    %267 = vmatprep.subr.mxu0 0.0
    %268 = vmatpush1.msra.mxu0 0.0
    %269 = vmatprep.subr.mxu0 0.0
    %270 = vmatpush1.msra.mxu0 0.0
    %271 = vmatprep.subr.mxu0 0.0
    %272 = vmatpush1.msra.mxu0 0.0
    %273 = vmatprep.subr.mxu0 0.0
    %274 = vmatpush1.msra.mxu0 0.0
    %275 = vmatprep.subr.mxu0 0.0
    %276 = vmatpush1.msra.mxu0 0.0
    %277 = vmatprep.subr.mxu0 0.0
    %278 = vmatpush1.msra.mxu0 0.0
    %279 = vmatprep.subr.mxu0 0.0
    %280 = vmatpush1.msra.mxu0 0.0
    %281 = vmatprep.subr.mxu0 0.0
    %282 = vmatpush1.msra.mxu0 0.0
    %283 = vmatprep.subr.mxu0 0.0
    %284 = vmatpush1.msra.mxu0 0.0
    %285 = vmatprep.subr.mxu0 0.0
    %286 = vmatpush1.msra.mxu0 0.0
    %287 = vmatprep.subr.mxu0 0.0
    %288 = vmatpush1.msra.mxu0 0.0
    %289 = vmatprep.subr.mxu0 0.0
    %290 = vmatpush1.msra.mxu0 0.0
    %291 = vmatprep.subr.mxu0 0.0
    %292 = vmatpush1.msra.mxu0 0.0
    %293 = vmatprep.subr.mxu0 0.0
    %294 = vmatpush1.msra.mxu0 0.0
    %295 = vmatprep.subr.mxu0 0.0
    %296 = vmatpush1.msra.mxu0 0.0
    %297 = vmatprep.subr.mxu0 0.0
    %298 = vmatpush1.msra.mxu0 0.0
    %299 = vmatprep.subr.mxu0 0.0
    %300 = vmatpush1.msra.mxu0 0.0
    %301 = vmatprep.subr.mxu0 0.0
    %302 = vmatpush1.msra.mxu0 0.0
    %303 = vmatprep.mubr.f32.mxu0 0.0
    %v304 = vand.u32 %v56, 4294901760
    %v305 = vsub.f32 %v56, %v304
    %306 = vmatmul.mubr.f32.gmra.mrb[0].mxu0 %v305
    %v307 = vpop.f32.mrb[0].mxu0
    %v308 = vadd.f32 %v226, %v307
    %v309 = vpop.f32.mrb[0].mxu0
    %310 = vmatprep.mubr.f32.mxu0 0.0
    %v311 = vand.u32 %v59, 4294901760
    %v312 = vsub.f32 %v59, %v311
    %313 = vmatmul.mubr.f32.gmra.mrb[0].mxu0 %v312
    %v314 = vpop.f32.mrb[0].mxu0
    %v315 = vadd.f32 %v232, %v314
    %v316 = vpop.f32.mrb[0].mxu0
    %317 = vdwg.mxu0
    %318 = vmatprep.subr.mxu0 0.0
    %v319 = vand.u32 %v45, 4294901760
    %320 = vmatpush1.msra.mxu0 %v319
    %321 = vmatprep.subr.mxu0 0.0
    %v322 = vand.u32 %v46, 4294901760
    %323 = vmatpush1.msra.mxu0 %v322
    %324 = vmatprep.subr.mxu0 0.0
    %325 = vmatpush1.msra.mxu0 0.0
    %326 = vmatprep.subr.mxu0 0.0
    %327 = vmatpush1.msra.mxu0 0.0
    %328 = vmatprep.subr.mxu0 0.0
    %329 = vmatpush1.msra.mxu0 0.0
    %330 = vmatprep.subr.mxu0 0.0
    %331 = vmatpush1.msra.mxu0 0.0
    %332 = vmatprep.subr.mxu0 0.0
    %333 = vmatpush1.msra.mxu0 0.0
    %334 = vmatprep.subr.mxu0 0.0
    %335 = vmatpush1.msra.mxu0 0.0
    %336 = vmatprep.subr.mxu0 0.0
    %337 = vmatpush1.msra.mxu0 0.0
    %338 = vmatprep.subr.mxu0 0.0
    %339 = vmatpush1.msra.mxu0 0.0
    %340 = vmatprep.subr.mxu0 0.0
    %341 = vmatpush1.msra.mxu0 0.0
    %342 = vmatprep.subr.mxu0 0.0
    %343 = vmatpush1.msra.mxu0 0.0
    %344 = vmatprep.subr.mxu0 0.0
    %345 = vmatpush1.msra.mxu0 0.0
    %346 = vmatprep.subr.mxu0 0.0
    %347 = vmatpush1.msra.mxu0 0.0
    %348 = vmatprep.subr.mxu0 0.0
    %349 = vmatpush1.msra.mxu0 0.0
    %350 = vmatprep.subr.mxu0 0.0
    %351 = vmatpush1.msra.mxu0 0.0
    %352 = vmatprep.subr.mxu0 0.0
    %353 = vmatpush1.msra.mxu0 0.0
    %354 = vmatprep.subr.mxu0 0.0
    %355 = vmatpush1.msra.mxu0 0.0
    %356 = vmatprep.subr.mxu0 0.0
    %357 = vmatpush1.msra.mxu0 0.0
    %358 = vmatprep.subr.mxu0 0.0
    %359 = vmatpush1.msra.mxu0 0.0
    %360 = vmatprep.subr.mxu0 0.0
    %361 = vmatpush1.msra.mxu0 0.0
    %362 = vmatprep.subr.mxu0 0.0
    %363 = vmatpush1.msra.mxu0 0.0
    %364 = vmatprep.subr.mxu0 0.0
    %365 = vmatpush1.msra.mxu0 0.0
    %366 = vmatprep.subr.mxu0 0.0
    %367 = vmatpush1.msra.mxu0 0.0
    %368 = vmatprep.subr.mxu0 0.0
    %369 = vmatpush1.msra.mxu0 0.0
    %370 = vmatprep.subr.mxu0 0.0
    %371 = vmatpush1.msra.mxu0 0.0
    %372 = vmatprep.subr.mxu0 0.0
    %373 = vmatpush1.msra.mxu0 0.0
    %374 = vmatprep.subr.mxu0 0.0
    %375 = vmatpush1.msra.mxu0 0.0
    %376 = vmatprep.subr.mxu0 0.0
    %377 = vmatpush1.msra.mxu0 0.0
    %378 = vmatprep.subr.mxu0 0.0
    %379 = vmatpush1.msra.mxu0 0.0
    %380 = vmatprep.subr.mxu0 0.0
    %381 = vmatpush1.msra.mxu0 0.0
    %382 = vmatprep.subr.mxu0 0.0
    %383 = vmatpush1.msra.mxu0 0.0
    %384 = vmatprep.mubr.f32.mxu0 0.0
    %v385 = vand.u32 %v56, 4294901760
    %v386 = vsub.f32 %v56, %v385
    %v387 = vand.u32 %v386, 4294901760
    %388 = vmatmul.mubr.f32.gmra.mrb[0].mxu0 %v387
    %v389 = vpop.f32.mrb[0].mxu0
    %v390 = vadd.f32 %v308, %v389
    %v391 = vpop.f32.mrb[0].mxu0
    %392 = vmatprep.mubr.f32.mxu0 0.0
    %v393 = vand.u32 %v59, 4294901760
    %v394 = vsub.f32 %v59, %v393
    %v395 = vand.u32 %v394, 4294901760
    %396 = vmatmul.mubr.f32.gmra.mrb[0].mxu0 %v395
    %v397 = vpop.f32.mrb[0].mxu0
    %v398 = vadd.f32 %v315, %v397
    %v399 = vpop.f32.mrb[0].mxu0
    %400 = vdwg.mxu0
    %401 = vmatprep.subr.mxu0 0.0
    %v402 = vand.u32 %v45, 4294901760
    %v403 = vsub.f32 %v45, %v402
    %v404 = vand.u32 %v403, 4294901760
    %405 = vmatpush1.msra.mxu0 %v404
    %406 = vmatprep.subr.mxu0 0.0
    %v407 = vand.u32 %v46, 4294901760
    %v408 = vsub.f32 %v46, %v407
    %v409 = vand.u32 %v408, 4294901760
    %410 = vmatpush1.msra.mxu0 %v409
    %411 = vmatprep.subr.mxu0 0.0
    %412 = vmatpush1.msra.mxu0 0.0
    %413 = vmatprep.subr.mxu0 0.0
    %414 = vmatpush1.msra.mxu0 0.0
    %415 = vmatprep.subr.mxu0 0.0
    %416 = vmatpush1.msra.mxu0 0.0
    %417 = vmatprep.subr.mxu0 0.0
    %418 = vmatpush1.msra.mxu0 0.0
    %419 = vmatprep.subr.mxu0 0.0
    %420 = vmatpush1.msra.mxu0 0.0
    %421 = vmatprep.subr.mxu0 0.0
    %422 = vmatpush1.msra.mxu0 0.0
    %423 = vmatprep.subr.mxu0 0.0
    %424 = vmatpush1.msra.mxu0 0.0
    %425 = vmatprep.subr.mxu0 0.0
    %426 = vmatpush1.msra.mxu0 0.0
    %427 = vmatprep.subr.mxu0 0.0
    %428 = vmatpush1.msra.mxu0 0.0
    %429 = vmatprep.subr.mxu0 0.0
    %430 = vmatpush1.msra.mxu0 0.0
    %431 = vmatprep.subr.mxu0 0.0
    %432 = vmatpush1.msra.mxu0 0.0
    %433 = vmatprep.subr.mxu0 0.0
    %434 = vmatpush1.msra.mxu0 0.0
    %435 = vmatprep.subr.mxu0 0.0
    %436 = vmatpush1.msra.mxu0 0.0
    %437 = vmatprep.subr.mxu0 0.0
    %438 = vmatpush1.msra.mxu0 0.0
    %439 = vmatprep.subr.mxu0 0.0
    %440 = vmatpush1.msra.mxu0 0.0
    %441 = vmatprep.subr.mxu0 0.0
    %442 = vmatpush1.msra.mxu0 0.0
    %443 = vmatprep.subr.mxu0 0.0
    %444 = vmatpush1.msra.mxu0 0.0
    %445 = vmatprep.subr.mxu0 0.0
    %446 = vmatpush1.msra.mxu0 0.0
    %447 = vmatprep.subr.mxu0 0.0
    %448 = vmatpush1.msra.mxu0 0.0
    %449 = vmatprep.subr.mxu0 0.0
    %450 = vmatpush1.msra.mxu0 0.0
    %451 = vmatprep.subr.mxu0 0.0
    %452 = vmatpush1.msra.mxu0 0.0
    %453 = vmatprep.subr.mxu0 0.0
    %454 = vmatpush1.msra.mxu0 0.0
    %455 = vmatprep.subr.mxu0 0.0
    %456 = vmatpush1.msra.mxu0 0.0
    %457 = vmatprep.subr.mxu0 0.0
    %458 = vmatpush1.msra.mxu0 0.0
    %459 = vmatprep.subr.mxu0 0.0
    %460 = vmatpush1.msra.mxu0 0.0
    %461 = vmatprep.subr.mxu0 0.0
    %462 = vmatpush1.msra.mxu0 0.0
    %463 = vmatprep.subr.mxu0 0.0
    %464 = vmatpush1.msra.mxu0 0.0
    %465 = vmatprep.subr.mxu0 0.0
    %466 = vmatpush1.msra.mxu0 0.0
    %467 = vmatprep.subr.mxu0 0.0
    %468 = vmatpush1.msra.mxu0 0.0
    %469 = vmatprep.subr.mxu0 0.0
    %470 = vmatpush1.msra.mxu0 0.0
    %471 = vmatprep.mubr.f32.mxu0 0.0
    %v472 = vand.u32 %v56, 4294901760
    %473 = vmatmul.mubr.f32.gmra.mrb[0].mxu0 %v472
    %v474 = vpop.f32.mrb[0].mxu0
    %v475 = vadd.f32 %v390, %v474
    %v476 = vpop.f32.mrb[0].mxu0
    %477 = vmatprep.mubr.f32.mxu0 0.0
    %v478 = vand.u32 %v59, 4294901760
    %479 = vmatmul.mubr.f32.gmra.mrb[0].mxu0 %v478
    %v480 = vpop.f32.mrb[0].mxu0
    %v481 = vadd.f32 %v398, %v480
    %v482 = vpop.f32.mrb[0].mxu0
    %483 = vdwg.mxu0
    %484 = vmatprep.subr.mxu0 0.0
    %v485 = vand.u32 %v45, 4294901760
    %486 = vmatpush1.msra.mxu0 %v485
    %487 = vmatprep.subr.mxu0 0.0
    %v488 = vand.u32 %v46, 4294901760
    %489 = vmatpush1.msra.mxu0 %v488
    %490 = vmatprep.subr.mxu0 0.0
    %491 = vmatpush1.msra.mxu0 0.0
    %492 = vmatprep.subr.mxu0 0.0
    %493 = vmatpush1.msra.mxu0 0.0
    %494 = vmatprep.subr.mxu0 0.0
    %495 = vmatpush1.msra.mxu0 0.0
    %496 = vmatprep.subr.mxu0 0.0
    %497 = vmatpush1.msra.mxu0 0.0
    %498 = vmatprep.subr.mxu0 0.0
    %499 = vmatpush1.msra.mxu0 0.0
    %500 = vmatprep.subr.mxu0 0.0
    %501 = vmatpush1.msra.mxu0 0.0
    %502 = vmatprep.subr.mxu0 0.0
    %503 = vmatpush1.msra.mxu0 0.0
    %504 = vmatprep.subr.mxu0 0.0
    %505 = vmatpush1.msra.mxu0 0.0
    %506 = vmatprep.subr.mxu0 0.0
    %507 = vmatpush1.msra.mxu0 0.0
    %508 = vmatprep.subr.mxu0 0.0
    %509 = vmatpush1.msra.mxu0 0.0
    %510 = vmatprep.subr.mxu0 0.0
    %511 = vmatpush1.msra.mxu0 0.0
    %512 = vmatprep.subr.mxu0 0.0
    %513 = vmatpush1.msra.mxu0 0.0
    %514 = vmatprep.subr.mxu0 0.0
    %515 = vmatpush1.msra.mxu0 0.0
    %516 = vmatprep.subr.mxu0 0.0
    %517 = vmatpush1.msra.mxu0 0.0
    %518 = vmatprep.subr.mxu0 0.0
    %519 = vmatpush1.msra.mxu0 0.0
    %520 = vmatprep.subr.mxu0 0.0
    %521 = vmatpush1.msra.mxu0 0.0
    %522 = vmatprep.subr.mxu0 0.0
    %523 = vmatpush1.msra.mxu0 0.0
    %524 = vmatprep.subr.mxu0 0.0
    %525 = vmatpush1.msra.mxu0 0.0
    %526 = vmatprep.subr.mxu0 0.0
    %527 = vmatpush1.msra.mxu0 0.0
    %528 = vmatprep.subr.mxu0 0.0
    %529 = vmatpush1.msra.mxu0 0.0
    %530 = vmatprep.subr.mxu0 0.0
    %531 = vmatpush1.msra.mxu0 0.0
    %532 = vmatprep.subr.mxu0 0.0
    %533 = vmatpush1.msra.mxu0 0.0
    %534 = vmatprep.subr.mxu0 0.0
    %535 = vmatpush1.msra.mxu0 0.0
    %536 = vmatprep.subr.mxu0 0.0
    %537 = vmatpush1.msra.mxu0 0.0
    %538 = vmatprep.subr.mxu0 0.0
    %539 = vmatpush1.msra.mxu0 0.0
    %540 = vmatprep.subr.mxu0 0.0
    %541 = vmatpush1.msra.mxu0 0.0
    %542 = vmatprep.subr.mxu0 0.0
    %543 = vmatpush1.msra.mxu0 0.0
    %544 = vmatprep.subr.mxu0 0.0
    %545 = vmatpush1.msra.mxu0 0.0
    %546 = vmatprep.subr.mxu0 0.0
    %547 = vmatpush1.msra.mxu0 0.0
    %548 = vmatprep.subr.mxu0 0.0
    %549 = vmatpush1.msra.mxu0 0.0
    %550 = vmatprep.mubr.f32.mxu0 0.0
    %v551 = vand.u32 %v56, 4294901760
    %552 = vmatmul.mubr.f32.gmra.mrb[0].mxu0 %v551
    %v553 = vpop.f32.mrb[0].mxu0
    %v554 = vadd.f32 %v475, %v553
    %v555 = vpop.f32.mrb[0].mxu0
    %556 = vmatprep.mubr.f32.mxu0 0.0
    %v557 = vand.u32 %v59, 4294901760
    %558 = vmatmul.mubr.f32.gmra.mrb[0].mxu0 %v557
    %v559 = vpop.f32.mrb[0].mxu0
    %v560 = vadd.f32 %v481, %v559
    %v561 = vpop.f32.mrb[0].mxu0
    %562 = vdwg.mxu0
    %vm563 = vcmask 261120
    %564 = vst.msk [vmem:[#allocation7] sm:$0xff] %vm563, %v554
    %565 = vst.msk [vmem:[#allocation7 + $0x8] sm:$0xff] %vm563, %v560
    // Predicated region
    $region22: #{cola_m_up_proj.1} parent=1 // pred_check
      _
    $region23: #{cola_m_up_proj.1} parent=1 // pred_check_branch
      %567 = sbr.rel (0) target = $region25
    $region24: #{cola_m_up_proj.1} parent=1 // pred_region
      %s569 = ssub.s32 256, 256
      %570 = vsyncadd [#allocation4], %s569
      %s571 = sshll.u32 [#allocation7], 4
      %s572 = int_to_ptr.vmem [resolvable:$true] %s571
      %577 = dma.vmem_to_hbm [thread:$0]  %s572, 256, %s3, [#allocation4], 128, 128, 8
    $region25: #{cola_m_up_proj.1} parent=1 // pred_fallthru
      _
    // Predicated region
    $region26: #{cola_m_up_proj.1} parent=1 // pred_check
      _
    $region27: #{cola_m_up_proj.1} parent=1 // pred_check_branch
      %579 = sbr.rel (0) target = $region29
    $region28: #{cola_m_up_proj.1} parent=1 // pred_region
      %580 = dma.done [#allocation4], 256
    $region29: #{cola_m_up_proj.1} parent=1 // pred_fallthru
      _
    %581 = vsyncpa [#allocation3], 1
    %582 = vsyncpa [#allocation6], 1
    %583 = vsyncpa [#allocation4], 1

</llo_original>
